<compile_context>
chip_gen: v5e
topology: v5e:2x2
jax: 0.10.0
libtpu: 0.0.40
codegen_flags: <defaults>
</compile_context>

<pallas_src>
import math

import jax
import jax.numpy as jnp
from jax.experimental import pallas as pl
from jax.experimental.pallas import tpu as pltpu


_SQRT_2_OVER_PI = math.sqrt(2.0 / math.pi)
_GELU_COEFF = 0.044715
# Folded constants: sqrt(2/pi) * (x + 0.044715*x^3) == x * (C1 + C2*x^2)
_C1 = _SQRT_2_OVER_PI
_C2 = _SQRT_2_OVER_PI * _GELU_COEFF

_LANES = 128


def _gelu_kernel(x_ref, o_ref):
    # Upcast to f32 for the math, cast back on store.
    x = x_ref[...].astype(jnp.float32)
    x2 = x * x
    inner = x * (_C1 + _C2 * x2)
    y = 0.5 * x * (1.0 + jnp.tanh(inner))
    o_ref[...] = y.astype(o_ref.dtype)


def gelu_pallas(x: jax.Array, *, tile_rows: int = 8192) -> jax.Array:
    """tanh-approx GELU, computed in a Pallas TPU kernel.

    Works for any float input shape/dtype; elementwise math is done on a
    flattened, lane-dense [rows, 128] view.
    """
    orig_shape = x.shape
    orig_dtype = x.dtype

    flat = x.reshape(-1)
    n = flat.shape[0]
    if n == 0:
        return x

    itemsize = jnp.dtype(orig_dtype).itemsize
    # Packed sublane count: f32 -> 8, bf16/f16 -> 16, 8-bit -> 32.
    sublanes = 32 // itemsize

    # Round tile_rows up to a multiple of the packed sublane count so the
    # block shape always satisfies the (sublane, 128) layout constraint.
    tile_rows = max(sublanes, ((tile_rows + sublanes - 1) // sublanes) * sublanes)

    # Fast path: no padding / no output slice when already lane-aligned.
    # Padded path: pad only up to one 128-lane row (<=127 extra elements);
    # partial tail *blocks* (in the row dim) are masked by Pallas.
    padded = (n % _LANES) != 0
    if padded:
        n_pad = pl.cdiv(n, _LANES) * _LANES
        flat = jnp.pad(flat, (0, n_pad - n))
    else:
        n_pad = n

    rows = n_pad // _LANES
    x2d = flat.reshape(rows, _LANES)

    # Clamp block to the array so small inputs compile as a single full block
    # (block shape equal to the array dims is always a legal layout).
    tile_rows_eff = min(tile_rows, rows)
    grid = (pl.cdiv(rows, tile_rows_eff),)

    # VMEM budget: input + output, double-buffered, plus headroom. Explicit so
    # big tiles never hit v5e's 16 MiB scoped default; stays well under the
    # v7x 64 MiB/TC physical VMEM.
    block_bytes = tile_rows_eff * _LANES * itemsize
    vmem_limit = 4 * block_bytes + (4 << 20)

    out2d = pl.pallas_call(
        _gelu_kernel,
        out_shape=jax.ShapeDtypeStruct((rows, _LANES), orig_dtype),
        grid_spec=pltpu.PrefetchScalarGridSpec(
            num_scalar_prefetch=0,
            grid=grid,
            in_specs=[pl.BlockSpec((tile_rows_eff, _LANES), lambda i: (i, 0))],
            out_specs=pl.BlockSpec((tile_rows_eff, _LANES), lambda i: (i, 0)),
        ),
        compiler_params=pltpu.CompilerParams(
            dimension_semantics=("parallel",),
            vmem_limit_bytes=vmem_limit,
        ),
    )(x2d)

    if padded:
        return out2d.reshape(-1)[:n].reshape(orig_shape)
    return out2d.reshape(orig_shape)


def gelu_ref(x: jax.Array) -> jax.Array:
    """Pure-JAX reference matching the PyTorch module exactly (computed in f32)."""
    xf = x.astype(jnp.float32)
    y = 0.5 * xf * (1.0 + jnp.tanh(_SQRT_2_OVER_PI * (xf + _GELU_COEFF * jnp.power(xf, 3))))
    return y.astype(x.dtype)


if __name__ == "__main__":
    key = jax.random.PRNGKey(0)
    k1, k2 = jax.random.split(key)

    # Same flavor of input as the PyTorch script: x = linspace(-3, 3, 100).
    # 100 elements -> exercises the padded path (pad to one 128-lane row).
    x_lin = jnp.linspace(-3.0, 3.0, 100, dtype=jnp.float32)

    # Multi-dim input, 2048 elements -> exercises the no-pad fast path.
    x_rand = jax.random.normal(k1, (2, 4, 16, 16), dtype=jnp.float32)

    # bf16 input -> exercises the packed-sublane alignment + f32 compute.
    x_bf16 = jax.random.normal(k2, (8, 256), dtype=jnp.bfloat16)

    out_lin = jax.block_until_ready(gelu_pallas(x_lin))
    out_rand = jax.block_until_ready(gelu_pallas(x_rand))
    out_bf16 = jax.block_until_ready(gelu_pallas(x_bf16))

    ref_lin = gelu_ref(x_lin)
    ref_rand = gelu_ref(x_rand)
    ref_bf16 = gelu_ref(x_bf16)

    assert out_lin.shape == x_lin.shape and out_lin.dtype == x_lin.dtype
    assert out_rand.shape == x_rand.shape and out_rand.dtype == x_rand.dtype
    assert out_bf16.shape == x_bf16.shape and out_bf16.dtype == x_bf16.dtype
    assert jnp.allclose(out_lin, ref_lin, atol=1e-6, rtol=1e-6)
    assert jnp.allclose(out_rand, ref_rand, atol=1e-6, rtol=1e-6)
    assert jnp.allclose(out_bf16.astype(jnp.float32), ref_bf16.astype(jnp.float32),
                        atol=1e-2, rtol=1e-2)

    print("KERNEL_OK")
</pallas_src>

<mosaic_0001>
module attributes {stable_mosaic.version = 11 : i64} {
  func.func @_gelu_kernel(%arg0: i32, %arg1: memref<1x128xf32, #tpu.memory_space<vmem>>, %arg2: memref<1x128xf32, #tpu.memory_space<vmem>>) attributes {dimension_semantics = [#tpu.dimension_semantics<parallel>], iteration_bounds = array<i64: 1>, scalar_prefetch = 0 : i64, scratch_operands = 0 : i64, tpu.core_type = #tpu.core_type<tc>, window_params = [{transform_indices = @transform_0, window_bounds = array<i64: 1, 128>}, {transform_indices = @transform_1, window_bounds = array<i64: 1, 128>}]} {
    %c0 = arith.constant 0 : index
    %c0_0 = arith.constant 0 : index
    %0 = vector.load %arg1[%c0, %c0_0] : memref<1x128xf32, #tpu.memory_space<vmem>>, vector<1x128xf32>
    %1 = arith.mulf %0, %0 : vector<1x128xf32>
    %cst = arith.constant 0.0356774069 : f32
    %2 = vector.broadcast %cst : f32 to vector<1x128xf32>
    %3 = arith.mulf %2, %1 : vector<1x128xf32>
    %cst_1 = arith.constant 0.797884583 : f32
    %4 = vector.broadcast %cst_1 : f32 to vector<1x128xf32>
    %5 = arith.addf %4, %3 : vector<1x128xf32>
    %6 = arith.mulf %0, %5 : vector<1x128xf32>
    %cst_2 = arith.constant 5.000000e-01 : f32
    %7 = vector.broadcast %cst_2 : f32 to vector<1x128xf32>
    %8 = arith.mulf %7, %0 : vector<1x128xf32>
    %9 = math.tanh %6 : vector<1x128xf32>
    %cst_3 = arith.constant 1.000000e+00 : f32
    %10 = vector.broadcast %cst_3 : f32 to vector<1x128xf32>
    %11 = arith.addf %10, %9 : vector<1x128xf32>
    %12 = arith.mulf %8, %11 : vector<1x128xf32>
    %c0_4 = arith.constant 0 : index
    %c0_5 = arith.constant 0 : index
    %13 = vector.load %arg2[%c0_4, %c0_5] : memref<1x128xf32, #tpu.memory_space<vmem>>, vector<1x128xf32>
    tpu.vector_store %arg2[%c0_4, %c0_5], %12 {strides = array<i32>} : memref<1x128xf32, #tpu.memory_space<vmem>>, vector<1x128xf32>,
    return
  }
  func.func @transform_0(%arg0: i32) -> (i32, i32) {
    %c0_i32 = arith.constant 0 : i32
    %c0_i32_0 = arith.constant 0 : i32
    return %arg0, %c0_i32 : i32, i32
  }
  func.func @transform_1(%arg0: i32) -> (i32, i32) {
    %c0_i32 = arith.constant 0 : i32
    %c0_i32_0 = arith.constant 0 : i32
    return %arg0, %c0_i32 : i32, i32
  }
}

</mosaic_0001>

<llo_original>
// kernel: tpu_custom_call.1
$region0: #{tpu_custom_call.1}
  #allocation0 [shape = 'u32[]', space=smem, size = 0x4, offset = 0x4, fixed_abs, tag = 'smem constant byte address 0x4 - core index']
  #allocation1 [shape = 'u32[72,128]{1,0:T(1,128)}', space=vmem, size = 0x9000, scoped, tag = 'internal scratch']
  %s0 = inlined_call_operand.hbm [shape: f32[1,128], index: 0, kind: input, shape index: {}]
  %s1 = inlined_call_operand.hbm [shape: f32[1,128], index: 1, kind: output, shape index: {}]
  %s2 = sld [smem:[#allocation0]]
  $region18: #{tpu_custom_call.1} parent=0
    _
  %s4 = ssub.s32 1, %s2
  %s5 = scalar_select 0, %s4, %s2
  $region1: #{tpu_custom_call.1} parent=0
    #allocation2 [shape = 'u8[512]{0}', space=vmem, size = 0x400, scoped, tag = 'input window, operand 0, single buffered']
    #allocation3 [shape = 's32[1]{0}', space=sflag, size = 0x4, scoped, tag = 'scoped memory for tpu_custom_call.1']
    #allocation4 [shape = 's32[1]{0}', space=sflag, size = 0x4, scoped, tag = 'scoped memory for tpu_custom_call.1']
    #allocation5 [shape = 'u8[512]{0}', space=vmem, size = 0x400, scoped, tag = 'output window, operand 0, single buffered']
    %6 = vsyncpa [#allocation3], 0
    %7 = vsyncpa [#allocation4], 0
    // Predicated region
    $region2: #{tpu_custom_call.1} parent=1 // pred_check
      _
    $region3: #{tpu_custom_call.1} parent=1 // pred_check_branch
      %9 = sbr.rel (0) target = $region5
    $region4: #{tpu_custom_call.1} parent=1 // pred_region
      %11 = vsyncadd [#allocation3], 0
      %s13 = sshll.u32 %s0, 4
      %s14 = int_to_ptr.hbm [resolvable:$true] %s13
      %s15 = sshll.u32 [#allocation2], 4
      %s16 = int_to_ptr.vmem [resolvable:$true] %s15
      %18 = dma.hbm_to_vmem [thread:$0]  %s14, 16, %s16, [#allocation3]
    $region5: #{tpu_custom_call.1} parent=1 // pred_fallthru
      _
    // Predicated region
    $region6: #{tpu_custom_call.1} parent=1 // pred_check
      _
    $region7: #{tpu_custom_call.1} parent=1 // pred_check_branch
      %20 = sbr.rel (0) target = $region9
    $region8: #{tpu_custom_call.1} parent=1 // pred_region
      %22 = dma.done [#allocation3], 16
    $region9: #{tpu_custom_call.1} parent=1 // pred_fallthru
      _
    %v23 = vld [vmem:[#allocation2] sm:$0x1]
    %v24 = vmul.f32 %v23, %v23
    %v25 = vmul.f32 %v24, 0.035677407
    %v26 = vadd.f32 %v25, 0.7978846
    %v27 = vmul.f32 %v23, %v26
    %v28 = vmul.f32 %v23, 0.5
    %v29 = vtanh.pop %v27
    %v30 = vadd.f32 %v29, 1.0
    %v31 = vmul.f32 %v28, %v30
    %32 = vst [vmem:[#allocation5] sm:$0x1] %v31
    // Predicated region
    $region10: #{tpu_custom_call.1} parent=1 // pred_check
      _
    $region11: #{tpu_custom_call.1} parent=1 // pred_check_branch
      %34 = sbr.rel (0) target = $region13
    $region12: #{tpu_custom_call.1} parent=1 // pred_region
      %36 = vsyncadd [#allocation4], 0
      %s38 = sshll.u32 [#allocation5], 4
      %s39 = int_to_ptr.vmem [resolvable:$true] %s38
      %s40 = sshll.u32 %s1, 4
      %s41 = int_to_ptr.hbm [resolvable:$true] %s40
      %43 = dma.vmem_to_hbm [thread:$0]  %s39, 16, %s41, [#allocation4]
    $region13: #{tpu_custom_call.1} parent=1 // pred_fallthru
      _
    // Predicated region
    $region14: #{tpu_custom_call.1} parent=1 // pred_check
      _
    $region15: #{tpu_custom_call.1} parent=1 // pred_check_branch
      %45 = sbr.rel (0) target = $region17
    $region16: #{tpu_custom_call.1} parent=1 // pred_region
      %47 = dma.done [#allocation4], 16
    $region17: #{tpu_custom_call.1} parent=1 // pred_fallthru
      _
    %48 = vsyncpa [#allocation3], 1
    %49 = vsyncpa [#allocation4], 1

</llo_original>
